<compile_context>
chip_gen: v5e
topology: v5e:2x2
jax: 0.10.0
libtpu: 0.0.40
codegen_flags: <defaults>
</compile_context>

<pallas_src>
import jax
import jax.numpy as jnp
from jax.experimental import pallas as pl
from jax.experimental.pallas import tpu as pltpu


def _round_up(n, m):
    return ((n + m - 1) // m) * m


def _mlp_kernel(x_ref, w1_ref, b1_ref, w2_ref, b2_ref, w3_ref, b3_ref, o_ref):
    # x: (TB, 44) f32. bf16 only on the MXU inputs; accumulate and post-process in f32.
    x = x_ref[...]
    h1 = jnp.dot(x.astype(jnp.bfloat16), w1_ref[...],
                 preferred_element_type=jnp.float32) + b1_ref[...]
    h1 = jnp.maximum(h1, 0.0)                                           # (TB, 64) f32
    h2 = jnp.dot(h1.astype(jnp.bfloat16), w2_ref[...],
                 preferred_element_type=jnp.float32) + b2_ref[...]
    h2 = jnp.maximum(h2, 0.0)                                           # (TB, 128) f32
    # Final N=1 layer on the VPU (+ XLU lane reduction) instead of a 1-wide MXU pass;
    # result is stored lane-dense as a (1, TB) row.
    out = jnp.sum(h2 * w3_ref[...], axis=-1) + b3_ref[0, 0]             # (TB,)
    o_ref[...] = out[None, :].astype(o_ref.dtype)


def value_network_forward(x, params, *, block_b=8192):
    """x: (B, 44) f32. Returns (B, 1) f32. Tiled over the batch dimension."""
    w1, b1, w2, b2, w3, b3 = params
    assert block_b % 128 == 0 and block_b >= 128, "block_b must be a multiple of 128"
    B, F = x.shape
    assert F == w1.shape[0]

    # --- batch tile selection ------------------------------------------------------
    # Lane-dense tiles (multiple of 128) so the (1, tb) output store is unmasked.
    # For medium batches force >= 2 grid steps so both v7x TensorCores get work.
    if B <= 1024:
        tb = min(block_b, _round_up(B, 128))
    elif B <= 2 * block_b:
        tb = min(block_b, _round_up(-(-B // 2), 128))
    else:
        tb = block_b
    b_pad = _round_up(B, tb)
    if b_pad != B:
        x = jnp.pad(x, ((0, b_pad - B), (0, 0)))
    num_tiles = b_pad // tb

    # bf16 weights for the MXU; biases and the VPU-path w3/b3 stay f32.
    w1_bf = w1.astype(jnp.bfloat16)
    w2_bf = w2.astype(jnp.bfloat16)
    w3_row = w3.reshape(1, w3.shape[0]).astype(jnp.float32)   # (1, 128) lane-aligned
    b3_s = b3.reshape(1, 1).astype(jnp.float32)               # scalar -> SMEM

    d1, d2 = w1.shape[1], w2.shape[1]
    flops = 2 * b_pad * (F * d1 + d1 * d2 + d2)
    bytes_accessed = (4 * b_pad * F + 2 * (w1.size + w2.size)
                      + 4 * (b1.size + b2.size + w3.size + b3.size) + 4 * b_pad)

    # VMEM budget from *padded* sizes: the (tb, 44) f32 x tile lane-pads to 128 lanes
    # (512 B/row per buffer, up to 3 buffers) and h1/h2 f32 + bf16 temporaries add
    # ~2-3 KiB/row. Raise the scoped limit accordingly (v5e default is only 16 MiB),
    # but keep it under v7x's 64 MiB physical VMEM.
    vmem_est = tb * 5 * 1024 + (4 << 20)
    vmem_limit = int(min(max(vmem_est, 32 << 20), 56 << 20))

    const = lambda i: (0, 0)            # weights: same block every step -> VMEM-resident
    x_index = lambda i: (i, 0)
    if num_tiles >= 3:
        # Deeper x pipeline: the narrow 176 B/row DMA is latency-bound; 3 buffers hide it.
        x_spec = pl.BlockSpec((tb, F), x_index, pipeline_mode=pl.Buffered(3))
    else:
        x_spec = pl.BlockSpec((tb, F), x_index)

    out = pl.pallas_call(
        _mlp_kernel,
        out_shape=jax.ShapeDtypeStruct((1, b_pad), jnp.float32),
        grid=(num_tiles,),
        in_specs=[
            x_spec,                                             # x: tiled over batch
            pl.BlockSpec(w1_bf.shape, const),
            pl.BlockSpec(b1.shape, const),
            pl.BlockSpec(w2_bf.shape, const),
            pl.BlockSpec(b2.shape, const),
            pl.BlockSpec(w3_row.shape, const),
            pl.BlockSpec(memory_space=pltpu.MemorySpace.SMEM),  # b3 scalar in SMEM
        ],
        out_specs=pl.BlockSpec((1, tb), lambda i: (0, i)),      # lane-dense output row
        compiler_params=pltpu.CompilerParams(
            dimension_semantics=("parallel",),                  # megacore sharding on v7x
            vmem_limit_bytes=vmem_limit),
        cost_estimate=pl.CostEstimate(
            flops=flops, transcendentals=0, bytes_accessed=bytes_accessed),
    )(x, w1_bf, b1, w2_bf, b2, w3_row, b3_s)

    return out[0, :B].reshape(B, 1)


def init_params(key):
    """Deterministic init matching nn.Linear shapes (weights stored transposed: (in, out))."""
    k1, k2, k3, k4, k5, k6 = jax.random.split(key, 6)

    def linear_init(kw, kb, fan_in, fan_out):
        bound = 1.0 / jnp.sqrt(jnp.float32(fan_in))   # PyTorch default U(-1/sqrt(in), 1/sqrt(in))
        w = jax.random.uniform(kw, (fan_in, fan_out), jnp.float32, -bound, bound)
        b = jax.random.uniform(kb, (1, fan_out), jnp.float32, -bound, bound)
        return w, b

    w1, b1 = linear_init(k1, k2, 44, 64)
    w2, b2 = linear_init(k3, k4, 64, 128)
    w3, b3 = linear_init(k5, k6, 128, 1)
    return (w1, b1, w2, b2, w3, b3)


def _ref_forward(x, params):
    """Pure f32 JAX reference (matches the original PyTorch module)."""
    w1, b1, w2, b2, w3, b3 = params
    h1 = jnp.maximum(x @ w1 + b1, 0.0)
    h2 = jnp.maximum(h1 @ w2 + b2, 0.0)
    return h2 @ w3 + b3


if __name__ == "__main__":
    key = jax.random.PRNGKey(0)
    kx, kp = jax.random.split(key)
    params = init_params(kp)

    # bf16 matmul inputs (f32 accumulation) -> compare against f32 ref with loose tolerance.
    TOL = dict(atol=2e-2, rtol=2e-2)

    # Small single-tile check (tb rounded up to 128 -> lane-dense output path).
    B = 8
    x = jax.random.normal(kx, (B, 44), jnp.float32)
    out = jax.block_until_ready(value_network_forward(x, params))
    ref = _ref_forward(x, params)
    assert out.shape == (B, 1), out.shape
    assert jnp.allclose(out, ref, **TOL), "mismatch vs. pure-JAX reference (B=8)"

    # Multi-tile (grid = 2) + batch-padding check with a small block size.
    B2 = 300
    x2 = jax.random.normal(kx, (B2, 44), jnp.float32)
    out2 = jax.block_until_ready(value_network_forward(x2, params, block_b=256))
    ref2 = _ref_forward(x2, params)
    assert out2.shape == (B2, 1), out2.shape
    assert jnp.allclose(out2, ref2, **TOL), "mismatch vs. pure-JAX reference (B=300)"

    # Longer grid (6 tiles) exercising the 3-deep buffered x pipeline.
    B3 = 1500
    x3 = jax.random.normal(kx, (B3, 44), jnp.float32)
    out3 = jax.block_until_ready(value_network_forward(x3, params, block_b=256))
    ref3 = _ref_forward(x3, params)
    assert out3.shape == (B3, 1), out3.shape
    assert jnp.allclose(out3, ref3, **TOL), "mismatch vs. pure-JAX reference (B=1500)"

    print("KERNEL_OK")
</pallas_src>

<mosaic_0001>
module attributes {stable_mosaic.version = 11 : i64} {
  func.func @_mlp_kernel(%arg0: i32, %arg1: memref<128x44xf32, #tpu.memory_space<vmem>>, %arg2: memref<44x64xbf16, #tpu.memory_space<vmem>>, %arg3: memref<1x64xf32, #tpu.memory_space<vmem>>, %arg4: memref<64x128xbf16, #tpu.memory_space<vmem>>, %arg5: memref<1x128xf32, #tpu.memory_space<vmem>>, %arg6: memref<1x128xf32, #tpu.memory_space<vmem>>, %arg7: memref<1x1xf32, #tpu.memory_space<smem>>, %arg8: memref<1x128xf32, #tpu.memory_space<vmem>>) attributes {dimension_semantics = [#tpu.dimension_semantics<parallel>], iteration_bounds = array<i64: 1>, scalar_prefetch = 0 : i64, scratch_operands = 0 : i64, tpu.core_type = #tpu.core_type<tc>, window_params = [{transform_indices = @transform_0, window_bounds = array<i64: 128, 44>}, {pipeline_mode = #tpu.pipeline_mode<synchronous>, transform_indices = @transform_1, window_bounds = array<i64: 44, 64>}, {pipeline_mode = #tpu.pipeline_mode<synchronous>, transform_indices = @transform_2, window_bounds = array<i64: 1, 64>}, {pipeline_mode = #tpu.pipeline_mode<synchronous>, transform_indices = @transform_3, window_bounds = array<i64: 64, 128>}, {pipeline_mode = #tpu.pipeline_mode<synchronous>, transform_indices = @transform_4, window_bounds = array<i64: 1, 128>}, {pipeline_mode = #tpu.pipeline_mode<synchronous>, transform_indices = @transform_5, window_bounds = array<i64: 1, 128>}, {transform_indices = @transform_6, window_bounds = array<i64: 1, 1>}, {transform_indices = @transform_7, window_bounds = array<i64: 1, 128>}]} {
    %c0 = arith.constant 0 : index
    %c0_0 = arith.constant 0 : index
    %0 = vector.load %arg1[%c0, %c0_0] : memref<128x44xf32, #tpu.memory_space<vmem>>, vector<128x44xf32>
    %1 = arith.truncf %0 : vector<128x44xf32> to vector<128x44xbf16>
    %c0_1 = arith.constant 0 : index
    %c0_2 = arith.constant 0 : index
    %2 = vector.load %arg2[%c0_1, %c0_2] : memref<44x64xbf16, #tpu.memory_space<vmem>>, vector<44x64xbf16>
    %cst = arith.constant dense<0.000000e+00> : vector<128x64xf32>
    %3 = tpu.matmul %1, %2, %cst {dimension_numbers = #tpu.dot_dimension_numbers<[1], [0], [0], [1], [0, 0, 1, 1], [], []>} : vector<128x44xbf16>, vector<44x64xbf16>, vector<128x64xf32> -> vector<128x64xf32>
    %c0_3 = arith.constant 0 : index
    %c0_4 = arith.constant 0 : index
    %4 = vector.load %arg3[%c0_3, %c0_4] : memref<1x64xf32, #tpu.memory_space<vmem>>, vector<1x64xf32>
    %5 = vector.broadcast %4 : vector<1x64xf32> to vector<128x64xf32>
    %6 = arith.addf %3, %5 : vector<128x64xf32>
    %cst_5 = arith.constant 0.000000e+00 : f32
    %7 = vector.broadcast %cst_5 : f32 to vector<128x64xf32>
    %8 = arith.maximumf %6, %7 : vector<128x64xf32>
    %9 = arith.truncf %8 : vector<128x64xf32> to vector<128x64xbf16>
    %c0_6 = arith.constant 0 : index
    %c0_7 = arith.constant 0 : index
    %10 = vector.load %arg4[%c0_6, %c0_7] : memref<64x128xbf16, #tpu.memory_space<vmem>>, vector<64x128xbf16>
    %cst_8 = arith.constant dense<0.000000e+00> : vector<128x128xf32>
    %11 = tpu.matmul %9, %10, %cst_8 {dimension_numbers = #tpu.dot_dimension_numbers<[1], [0], [0], [1], [0, 0, 1, 1], [], []>} : vector<128x64xbf16>, vector<64x128xbf16>, vector<128x128xf32> -> vector<128x128xf32>
    %c0_9 = arith.constant 0 : index
    %c0_10 = arith.constant 0 : index
    %12 = vector.load %arg5[%c0_9, %c0_10] : memref<1x128xf32, #tpu.memory_space<vmem>>, vector<1x128xf32>
    %13 = vector.broadcast %12 : vector<1x128xf32> to vector<128x128xf32>
    %14 = arith.addf %11, %13 : vector<128x128xf32>
    %cst_11 = arith.constant 0.000000e+00 : f32
    %15 = vector.broadcast %cst_11 : f32 to vector<128x128xf32>
    %16 = arith.maximumf %14, %15 : vector<128x128xf32>
    %c0_12 = arith.constant 0 : index
    %c0_13 = arith.constant 0 : index
    %17 = vector.load %arg6[%c0_12, %c0_13] : memref<1x128xf32, #tpu.memory_space<vmem>>, vector<1x128xf32>
    %18 = vector.broadcast %17 : vector<1x128xf32> to vector<128x128xf32>
    %19 = arith.mulf %16, %18 : vector<128x128xf32>
    %cst_14 = arith.constant dense<0.000000e+00> : vector<128xf32>
    %20 = vector.multi_reduction <add>, %19, %cst_14 [1] : vector<128x128xf32> to vector<128xf32>
    %c0_15 = arith.constant 0 : index
    %c0_16 = arith.constant 0 : index
    %21 = memref.load %arg7[%c0_15, %c0_16] : memref<1x1xf32, #tpu.memory_space<smem>>
    %22 = vector.broadcast %21 : f32 to vector<128xf32>
    %23 = arith.addf %20, %22 : vector<128xf32>
    %24 = vector.shape_cast %23 : vector<128xf32> to vector<1x128xf32>
    %c0_17 = arith.constant 0 : index
    %c0_18 = arith.constant 0 : index
    %25 = vector.load %arg8[%c0_17, %c0_18] : memref<1x128xf32, #tpu.memory_space<vmem>>, vector<1x128xf32>
    tpu.vector_store %arg8[%c0_17, %c0_18], %24 {strides = array<i32>} : memref<1x128xf32, #tpu.memory_space<vmem>>, vector<1x128xf32>,
    return
  }
  func.func @transform_0(%arg0: i32) -> (i32, i32) {
    %c0_i32 = arith.constant 0 : i32
    %c0_i32_0 = arith.constant 0 : i32
    return %arg0, %c0_i32 : i32, i32
  }
  func.func @transform_1(%arg0: i32) -> (i32, i32) {
    %c0_i32 = arith.constant 0 : i32
    %c0_i32_0 = arith.constant 0 : i32
    %c0_i32_1 = arith.constant 0 : i32
    return %c0_i32, %c0_i32_0 : i32, i32
  }
  func.func @transform_2(%arg0: i32) -> (i32, i32) {
    %c0_i32 = arith.constant 0 : i32
    %c0_i32_0 = arith.constant 0 : i32
    %c0_i32_1 = arith.constant 0 : i32
    return %c0_i32, %c0_i32_0 : i32, i32
  }
  func.func @transform_3(%arg0: i32) -> (i32, i32) {
    %c0_i32 = arith.constant 0 : i32
    %c0_i32_0 = arith.constant 0 : i32
    %c0_i32_1 = arith.constant 0 : i32
    return %c0_i32, %c0_i32_0 : i32, i32
  }
  func.func @transform_4(%arg0: i32) -> (i32, i32) {
    %c0_i32 = arith.constant 0 : i32
    %c0_i32_0 = arith.constant 0 : i32
    %c0_i32_1 = arith.constant 0 : i32
    return %c0_i32, %c0_i32_0 : i32, i32
  }
  func.func @transform_5(%arg0: i32) -> (i32, i32) {
    %c0_i32 = arith.constant 0 : i32
    %c0_i32_0 = arith.constant 0 : i32
    %c0_i32_1 = arith.constant 0 : i32
    return %c0_i32, %c0_i32_0 : i32, i32
  }
  func.func @transform_6(%arg0: i32) -> (i32, i32) {
    %c0_i32 = arith.constant 0 : i32
    %c0_i32_0 = arith.constant 0 : i32
    %c0_i32_1 = arith.constant 0 : i32
    return %c0_i32, %c0_i32_0 : i32, i32
  }
  func.func @transform_7(%arg0: i32) -> (i32, i32) {
    %c0_i32 = arith.constant 0 : i32
    %c0_i32_0 = arith.constant 0 : i32
    return %c0_i32, %arg0 : i32, i32
  }
}

</mosaic_0001>

<llo_original>
// kernel: tpu_custom_call.1
$region0: #{tpu_custom_call.1}
  #allocation0 [shape = 'u32[]', space=smem, size = 0x4, offset = 0x4, fixed_abs, tag = 'smem constant byte address 0x4 - core index']
  #allocation1 [shape = 'u32[72,128]{1,0:T(1,128)}', space=vmem, size = 0x9000, scoped, tag = 'internal scratch']
  #allocation2 [shape = 'f32[1,1]{1,0:T(1,128)S(6)}', space=smem, size = 0x200, scoped, tag = 'scoped memory for tpu_custom_call.1']
  %s0 = inlined_call_operand.vmem [shape: f32[128,44], index: 0, kind: input, shape index: {}]
  %s1 = inlined_call_operand.vmem [shape: bf16[44,64], index: 1, kind: input, shape index: {}]
  %s2 = inlined_call_operand.vmem [shape: f32[1,64], index: 2, kind: input, shape index: {}]
  %s3 = inlined_call_operand.vmem [shape: bf16[64,128], index: 3, kind: input, shape index: {}]
  %s4 = inlined_call_operand.vmem [shape: f32[1,128], index: 4, kind: input, shape index: {}]
  %s5 = inlined_call_operand.vmem [shape: f32[1,128], index: 5, kind: input, shape index: {}]
  %s6 = inlined_call_operand.<no memory space> [shape: f32[1,1], index: 6, kind: input, shape index: {}]
  %s7 = inlined_call_operand.hbm [shape: f32[1,128], index: 7, kind: output, shape index: {}]
  %s8 = sld [smem:[#allocation0]]
  $region38: #{tpu_custom_call.1} parent=0
    _
  %s10 = ssub.s32 1, %s8
  %s11 = scalar_select 0, %s10, %s8
  %12 = sst [smem:[#allocation2]] %s6
  $region1: #{tpu_custom_call.1} parent=0
    #allocation3 [shape = 'u8[512]{0}', space=vmem, size = 0x400, scoped, tag = 'output window, operand 0, single buffered']
    #allocation4 [shape = 's32[1]{0}', space=sflag, size = 0x4, scoped, tag = 'scoped memory for tpu_custom_call.1']
    %13 = vsyncpa [#allocation4], 0
    // Predicated region
    $region2: #{tpu_custom_call.1} parent=1 // pred_check
      _
    $region3: #{tpu_custom_call.1} parent=1 // pred_check_branch
      %15 = sbr.rel (0) target = $region5
    $region4: #{tpu_custom_call.1} parent=1 // pred_region
      _
    $region5: #{tpu_custom_call.1} parent=1 // pred_fallthru
      _
    // Predicated region
    $region6: #{tpu_custom_call.1} parent=1 // pred_check
      _
    $region7: #{tpu_custom_call.1} parent=1 // pred_check_branch
      %17 = sbr.rel (0) target = $region9
    $region8: #{tpu_custom_call.1} parent=1 // pred_region
      _
    $region9: #{tpu_custom_call.1} parent=1 // pred_fallthru
      _
    // Predicated region
    $region10: #{tpu_custom_call.1} parent=1 // pred_check
      _
    $region11: #{tpu_custom_call.1} parent=1 // pred_check_branch
      %19 = sbr.rel (0) target = $region13
    $region12: #{tpu_custom_call.1} parent=1 // pred_region
      _
    $region13: #{tpu_custom_call.1} parent=1 // pred_fallthru
      _
    // Predicated region
    $region14: #{tpu_custom_call.1} parent=1 // pred_check
      _
    $region15: #{tpu_custom_call.1} parent=1 // pred_check_branch
      %21 = sbr.rel (0) target = $region17
    $region16: #{tpu_custom_call.1} parent=1 // pred_region
      _
    $region17: #{tpu_custom_call.1} parent=1 // pred_fallthru
      _
    // Predicated region
    $region18: #{tpu_custom_call.1} parent=1 // pred_check
      _
    $region19: #{tpu_custom_call.1} parent=1 // pred_check_branch
      %23 = sbr.rel (0) target = $region21
    $region20: #{tpu_custom_call.1} parent=1 // pred_region
      _
    $region21: #{tpu_custom_call.1} parent=1 // pred_fallthru
      _
    // Predicated region
    $region22: #{tpu_custom_call.1} parent=1 // pred_check
      _
    $region23: #{tpu_custom_call.1} parent=1 // pred_check_branch
      %25 = sbr.rel (0) target = $region25
    $region24: #{tpu_custom_call.1} parent=1 // pred_region
      _
    $region25: #{tpu_custom_call.1} parent=1 // pred_fallthru
      _
    // Predicated region
    $region26: #{tpu_custom_call.1} parent=1 // pred_check
      _
    $region27: #{tpu_custom_call.1} parent=1 // pred_check_branch
      %27 = sbr.rel (0) target = $region29
    $region28: #{tpu_custom_call.1} parent=1 // pred_region
      _
    $region29: #{tpu_custom_call.1} parent=1 // pred_fallthru
      _
    %v29 = vld [vmem:[%s0] sm:$0xff]
    %v30 = vld [vmem:[%s0 + $0x8] sm:$0xff]
    %v31 = vld [vmem:[%s0 + $0x10] sm:$0xff]
    %v32 = vld [vmem:[%s0 + $0x18] sm:$0xff]
    %v33 = vld [vmem:[%s0 + $0x20] sm:$0xff]
    %v34 = vld [vmem:[%s0 + $0x28] sm:$0xff]
    %v35 = vld [vmem:[%s0 + $0x30] sm:$0xff]
    %v36 = vld [vmem:[%s0 + $0x38] sm:$0xff]
    %v37 = vld [vmem:[%s0 + $0x40] sm:$0xff]
    %v38 = vld [vmem:[%s0 + $0x48] sm:$0xff]
    %v39 = vld [vmem:[%s0 + $0x50] sm:$0xff]
    %v40 = vld [vmem:[%s0 + $0x58] sm:$0xff]
    %v41 = vld [vmem:[%s0 + $0x60] sm:$0xff]
    %v42 = vld [vmem:[%s0 + $0x68] sm:$0xff]
    %v43 = vld [vmem:[%s0 + $0x70] sm:$0xff]
    %v44 = vld [vmem:[%s0 + $0x78] sm:$0xff]
    %v45 = vpack.c.bf16 %v30, %v29
    %v46 = vpack.c.bf16 %v32, %v31
    %v47 = vpack.c.bf16 %v34, %v33
    %v48 = vpack.c.bf16 %v36, %v35
    %v49 = vpack.c.bf16 %v38, %v37
    %v50 = vpack.c.bf16 %v40, %v39
    %v51 = vpack.c.bf16 %v42, %v41
    %v52 = vpack.c.bf16 %v44, %v43
    %v53 = vld [vmem:[%s1] sm:$0xf]
    %v54 = vld [vmem:[%s1 + $0x4] sm:$0xf]
    %v55 = vld [vmem:[%s1 + $0x8] sm:$0xf]
    %v56 = vld [vmem:[%s1 + $0xc] sm:$0xf]
    %v57 = vld [vmem:[%s1 + $0x10] sm:$0xf]
    %v58 = vld [vmem:[%s1 + $0x14] sm:$0x3]
    %v59 = vld [vmem:[%s2] sm:$0x1]
    %v61 = vperm.slane %v59, 0
    %v69 = vunpack.c.l.b16 %v53
    %v70 = vunpack.c.l.b16 %v54
    %v71 = vunpack.c.l.b16 %v55
    %v72 = vunpack.c.l.b16 %v56
    %v73 = vunpack.c.l.b16 %v57
    %v74 = vunpack.c.l.b16 %v58
    %v75 = vpack.c.b16 %v70, %v69
    %v76 = vpack.c.b16 %v72, %v71
    %v77 = vpack.c.b16 %v74, %v73
    %vm80 = vcmask 359424
    %v82 = vsel %vm80, %v45, 0
    %v85 = vsel %vm80, %v46, 0
    %v88 = vsel %vm80, %v47, 0
    %v91 = vsel %vm80, %v48, 0
    %v94 = vsel %vm80, %v49, 0
    %v97 = vsel %vm80, %v50, 0
    %v100 = vsel %vm80, %v51, 0
    %v103 = vsel %vm80, %v52, 0
    %vm105 = vcmask 1045504
    %v107 = vsel %vm105, %v77, 0
    %109 = vmatpush.bf16.msra.mxu0 0
    %110 = vmatpush.bf16.msra.mxu0 0
    %111 = vmatpush.bf16.msra.mxu0 0
    %112 = vmatpush.bf16.msra.mxu0 0
    %113 = vmatpush.bf16.msra.mxu0 0
    %114 = vmatpush.bf16.msra.mxu0 %v107
    %115 = vmatpush.bf16.msra.mxu0 %v76
    %116 = vmatpush.bf16.msra.mxu0 %v75
    %117 = vmatmul.bf16.gmra.mxu0 %v82
    %v118 = vpop.f32.mrf.mxu0
    %v119 = vadd.f32 %v61, %v118
    %v120 = vpop.f32.mrf.mxu0
    %v121 = vadd.f32 %v61, %v120
    %122 = vmatmul.bf16.gmra.mxu0 %v85
    %v123 = vpop.f32.mrf.mxu0
    %v124 = vadd.f32 %v61, %v123
    %v125 = vpop.f32.mrf.mxu0
    %v126 = vadd.f32 %v61, %v125
    %127 = vmatmul.bf16.gmra.mxu0 %v88
    %v128 = vpop.f32.mrf.mxu0
    %v129 = vadd.f32 %v61, %v128
    %v130 = vpop.f32.mrf.mxu0
    %v131 = vadd.f32 %v61, %v130
    %132 = vmatmul.bf16.gmra.mxu0 %v91
    %v133 = vpop.f32.mrf.mxu0
    %v134 = vadd.f32 %v61, %v133
    %v135 = vpop.f32.mrf.mxu0
    %v136 = vadd.f32 %v61, %v135
    %137 = vmatmul.bf16.gmra.mxu0 %v94
    %v138 = vpop.f32.mrf.mxu0
    %v139 = vadd.f32 %v61, %v138
    %v140 = vpop.f32.mrf.mxu0
    %v141 = vadd.f32 %v61, %v140
    %142 = vmatmul.bf16.gmra.mxu0 %v97
    %v143 = vpop.f32.mrf.mxu0
    %v144 = vadd.f32 %v61, %v143
    %v145 = vpop.f32.mrf.mxu0
    %v146 = vadd.f32 %v61, %v145
    %147 = vmatmul.bf16.gmra.mxu0 %v100
    %v148 = vpop.f32.mrf.mxu0
    %v149 = vadd.f32 %v61, %v148
    %v150 = vpop.f32.mrf.mxu0
    %v151 = vadd.f32 %v61, %v150
    %152 = vmatmul.bf16.gmra.mxu0 %v103
    %v153 = vpop.f32.mrf.mxu0
    %v154 = vadd.f32 %v61, %v153
    %v155 = vpop.f32.mrf.mxu0
    %v156 = vadd.f32 %v61, %v155
    %157 = vdwg.mxu0
    %v158 = vmax.f32 %v119, 0.0
    %v159 = vmax.f32 %v121, 0.0
    %v160 = vmax.f32 %v124, 0.0
    %v161 = vmax.f32 %v126, 0.0
    %v162 = vmax.f32 %v129, 0.0
    %v163 = vmax.f32 %v131, 0.0
    %v164 = vmax.f32 %v134, 0.0
    %v165 = vmax.f32 %v136, 0.0
    %v166 = vmax.f32 %v139, 0.0
    %v167 = vmax.f32 %v141, 0.0
    %v168 = vmax.f32 %v144, 0.0
    %v169 = vmax.f32 %v146, 0.0
    %v170 = vmax.f32 %v149, 0.0
    %v171 = vmax.f32 %v151, 0.0
    %v172 = vmax.f32 %v154, 0.0
    %v173 = vmax.f32 %v156, 0.0
    %v174 = vpack.c.bf16 %v159, %v158
    %v175 = vpack.c.bf16 %v161, %v160
    %v176 = vpack.c.bf16 %v163, %v162
    %v177 = vpack.c.bf16 %v165, %v164
    %v178 = vpack.c.bf16 %v167, %v166
    %v179 = vpack.c.bf16 %v169, %v168
    %v180 = vpack.c.bf16 %v171, %v170
    %v181 = vpack.c.bf16 %v173, %v172
    %v182 = vld [vmem:[%s3] sm:$0xf]
    %v183 = vld [vmem:[%s3 + $0x4] sm:$0xf]
    %v184 = vld [vmem:[%s3 + $0x8] sm:$0xf]
    %v185 = vld [vmem:[%s3 + $0xc] sm:$0xf]
    %v186 = vld [vmem:[%s3 + $0x10] sm:$0xf]
    %v187 = vld [vmem:[%s3 + $0x14] sm:$0xf]
    %v188 = vld [vmem:[%s3 + $0x18] sm:$0xf]
    %v189 = vld [vmem:[%s3 + $0x1c] sm:$0xf]
    %v190 = vld [vmem:[%s4] sm:$0x1]
    %v192 = vperm.slane %v190, 0
    %v202 = vunpack.c.l.b16 %v182
    %v203 = vunpack.c.l.b16 %v183
    %v204 = vunpack.c.l.b16 %v184
    %v205 = vunpack.c.l.b16 %v185
    %v206 = vunpack.c.l.b16 %v186
    %v207 = vunpack.c.l.b16 %v187
    %v208 = vunpack.c.l.b16 %v188
    %v209 = vunpack.c.l.b16 %v189
    %v210 = vpack.c.b16 %v203, %v202
    %v211 = vpack.c.b16 %v205, %v204
    %v212 = vpack.c.b16 %v207, %v206
    %v213 = vpack.c.b16 %v209, %v208
    %vm218 = vcmask 523264
    %v220 = vsel %vm218, %v174, 0
    %v223 = vsel %vm218, %v175, 0
    %v226 = vsel %vm218, %v176, 0
    %v229 = vsel %vm218, %v177, 0
    %v232 = vsel %vm218, %v178, 0
    %v235 = vsel %vm218, %v179, 0
    %v238 = vsel %vm218, %v180, 0
    %v241 = vsel %vm218, %v181, 0
    %243 = vmatpush.bf16.msra.mxu0 0
    %244 = vmatpush.bf16.msra.mxu0 0
    %245 = vmatpush.bf16.msra.mxu0 0
    %246 = vmatpush.bf16.msra.mxu0 0
    %247 = vmatpush.bf16.msra.mxu0 %v213
    %248 = vmatpush.bf16.msra.mxu0 %v212
    %249 = vmatpush.bf16.msra.mxu0 %v211
    %250 = vmatpush.bf16.msra.mxu0 %v210
    %251 = vmatmul.bf16.gmra.mxu0 %v220
    %v252 = vpop.f32.mrf.mxu0
    %v253 = vadd.f32 %v192, %v252
    %v254 = vpop.f32.mrf.mxu0
    %v255 = vadd.f32 %v192, %v254
    %256 = vmatmul.bf16.gmra.mxu0 %v223
    %v257 = vpop.f32.mrf.mxu0
    %v258 = vadd.f32 %v192, %v257
    %v259 = vpop.f32.mrf.mxu0
    %v260 = vadd.f32 %v192, %v259
    %261 = vmatmul.bf16.gmra.mxu0 %v226
    %v262 = vpop.f32.mrf.mxu0
    %v263 = vadd.f32 %v192, %v262
    %v264 = vpop.f32.mrf.mxu0
    %v265 = vadd.f32 %v192, %v264
    %266 = vmatmul.bf16.gmra.mxu0 %v229
    %v267 = vpop.f32.mrf.mxu0
    %v268 = vadd.f32 %v192, %v267
    %v269 = vpop.f32.mrf.mxu0
    %v270 = vadd.f32 %v192, %v269
    %271 = vmatmul.bf16.gmra.mxu0 %v232
    %v272 = vpop.f32.mrf.mxu0
    %v273 = vadd.f32 %v192, %v272
    %v274 = vpop.f32.mrf.mxu0
    %v275 = vadd.f32 %v192, %v274
    %276 = vmatmul.bf16.gmra.mxu0 %v235
    %v277 = vpop.f32.mrf.mxu0
    %v278 = vadd.f32 %v192, %v277
    %v279 = vpop.f32.mrf.mxu0
    %v280 = vadd.f32 %v192, %v279
    %281 = vmatmul.bf16.gmra.mxu0 %v238
    %v282 = vpop.f32.mrf.mxu0
    %v283 = vadd.f32 %v192, %v282
    %v284 = vpop.f32.mrf.mxu0
    %v285 = vadd.f32 %v192, %v284
    %286 = vmatmul.bf16.gmra.mxu0 %v241
    %v287 = vpop.f32.mrf.mxu0
    %v288 = vadd.f32 %v192, %v287
    %v289 = vpop.f32.mrf.mxu0
    %v290 = vadd.f32 %v192, %v289
    %291 = vdwg.mxu0
    %v292 = vmax.f32 %v253, 0.0
    %v293 = vmax.f32 %v255, 0.0
    %v294 = vmax.f32 %v258, 0.0
    %v295 = vmax.f32 %v260, 0.0
    %v296 = vmax.f32 %v263, 0.0
    %v297 = vmax.f32 %v265, 0.0
    %v298 = vmax.f32 %v268, 0.0
    %v299 = vmax.f32 %v270, 0.0
    %v300 = vmax.f32 %v273, 0.0
    %v301 = vmax.f32 %v275, 0.0
    %v302 = vmax.f32 %v278, 0.0
    %v303 = vmax.f32 %v280, 0.0
    %v304 = vmax.f32 %v283, 0.0
    %v305 = vmax.f32 %v285, 0.0
    %v306 = vmax.f32 %v288, 0.0
    %v307 = vmax.f32 %v290, 0.0
    %v308 = vld [vmem:[%s5] sm:$0x1]
    %v310 = vperm.slane %v308, 0
    %v312 = vmul.f32 %v292, %v310
    %v313 = vmul.f32 %v293, %v310
    %v314 = vmul.f32 %v294, %v310
    %v315 = vmul.f32 %v295, %v310
    %v316 = vmul.f32 %v296, %v310
    %v317 = vmul.f32 %v297, %v310
    %v318 = vmul.f32 %v298, %v310
    %v319 = vmul.f32 %v299, %v310
    %v320 = vmul.f32 %v300, %v310
    %v321 = vmul.f32 %v301, %v310
    %v322 = vmul.f32 %v302, %v310
    %v323 = vmul.f32 %v303, %v310
    %v324 = vmul.f32 %v304, %v310
    %v325 = vmul.f32 %v305, %v310
    %v326 = vmul.f32 %v306, %v310
    %v327 = vmul.f32 %v307, %v310
    %328 = vadd.xlane.f32.xlu0 %v312
    %v329 = vpop.xlane.xlu0 %328
    %330 = vadd.xlane.f32.xlu0 %v313
    %v331 = vpop.xlane.xlu0 %330
    %332 = vadd.xlane.f32.xlu0 %v314
    %v333 = vpop.xlane.xlu0 %332
    %334 = vadd.xlane.f32.xlu0 %v315
    %v335 = vpop.xlane.xlu0 %334
    %336 = vadd.xlane.f32.xlu0 %v316
    %v337 = vpop.xlane.xlu0 %336
    %338 = vadd.xlane.f32.xlu0 %v317
    %v339 = vpop.xlane.xlu0 %338
    %340 = vadd.xlane.f32.xlu0 %v318
    %v341 = vpop.xlane.xlu0 %340
    %342 = vadd.xlane.f32.xlu0 %v319
    %v343 = vpop.xlane.xlu0 %342
    %344 = vadd.xlane.f32.xlu0 %v320
    %v345 = vpop.xlane.xlu0 %344
    %346 = vadd.xlane.f32.xlu0 %v321
    %v347 = vpop.xlane.xlu0 %346
    %348 = vadd.xlane.f32.xlu0 %v322
    %v349 = vpop.xlane.xlu0 %348
    %350 = vadd.xlane.f32.xlu0 %v323
    %v351 = vpop.xlane.xlu0 %350
    %352 = vadd.xlane.f32.xlu0 %v324
    %v353 = vpop.xlane.xlu0 %352
    %354 = vadd.xlane.f32.xlu0 %v325
    %v355 = vpop.xlane.xlu0 %354
    %356 = vadd.xlane.f32.xlu0 %v326
    %v357 = vpop.xlane.xlu0 %356
    %358 = vadd.xlane.f32.xlu0 %v327
    %v359 = vpop.xlane.xlu0 %358
    %s360 = sld [smem:[#allocation2]]
    %v361 = vstv %s360
    %v362 = vadd.f32 %v329, %v361
    %v363 = vadd.f32 %v331, %v361
    %v364 = vadd.f32 %v333, %v361
    %v365 = vadd.f32 %v335, %v361
    %v366 = vadd.f32 %v337, %v361
    %v367 = vadd.f32 %v339, %v361
    %v368 = vadd.f32 %v341, %v361
    %v369 = vadd.f32 %v343, %v361
    %v370 = vadd.f32 %v345, %v361
    %v371 = vadd.f32 %v347, %v361
    %v372 = vadd.f32 %v349, %v361
    %v373 = vadd.f32 %v351, %v361
    %v374 = vadd.f32 %v353, %v361
    %v375 = vadd.f32 %v355, %v361
    %v376 = vadd.f32 %v357, %v361
    %v377 = vadd.f32 %v359, %v361
    %v394 = vlaneseq
    %v395 = vand.u32 %v394, 127
    %v396 = vperm.slane %v362, %v395
    %v397 = vadd.s32 %v395, 4294967288
    %v398 = vperm.slane %v363, %v397
    %vm399 = vcmask 130112
    %v400 = vsel %vm399, %v398, %v396
    %v401 = vadd.s32 %v395, 4294967280
    %v402 = vperm.slane %v364, %v401
    %vm403 = vcmask 195712
    %v404 = vsel %vm403, %v402, %v400
    %v405 = vadd.s32 %v395, 4294967272
    %v406 = vperm.slane %v365, %v405
    %vm407 = vcmask 261312
    %v408 = vsel %vm407, %v406, %v404
    %v409 = vadd.s32 %v395, 4294967264
    %v410 = vperm.slane %v366, %v409
    %vm411 = vcmask 326912
    %v412 = vsel %vm411, %v410, %v408
    %v413 = vadd.s32 %v395, 4294967256
    %v414 = vperm.slane %v367, %v413
    %vm415 = vcmask 392512
    %v416 = vsel %vm415, %v414, %v412
    %v417 = vadd.s32 %v395, 4294967248
    %v418 = vperm.slane %v368, %v417
    %vm419 = vcmask 458112
    %v420 = vsel %vm419, %v418, %v416
    %v421 = vadd.s32 %v395, 4294967240
    %v422 = vperm.slane %v369, %v421
    %vm423 = vcmask 523712
    %v424 = vsel %vm423, %v422, %v420
    %v425 = vadd.s32 %v395, 4294967232
    %v426 = vperm.slane %v370, %v425
    %vm427 = vcmask 589312
    %v428 = vsel %vm427, %v426, %v424
    %v429 = vadd.s32 %v395, 4294967224
    %v430 = vperm.slane %v371, %v429
    %vm431 = vcmask 654912
    %v432 = vsel %vm431, %v430, %v428
    %v433 = vadd.s32 %v395, 4294967216
    %v434 = vperm.slane %v372, %v433
    %vm435 = vcmask 720512
    %v436 = vsel %vm435, %v434, %v432
    %v437 = vadd.s32 %v395, 4294967208
    %v438 = vperm.slane %v373, %v437
    %vm439 = vcmask 786112
    %v440 = vsel %vm439, %v438, %v436
    %v441 = vadd.s32 %v395, 4294967200
    %v442 = vperm.slane %v374, %v441
    %vm443 = vcmask 851712
    %v444 = vsel %vm443, %v442, %v440
    %v445 = vadd.s32 %v395, 4294967192
    %v446 = vperm.slane %v375, %v445
    %vm447 = vcmask 917312
    %v448 = vsel %vm447, %v446, %v444
    %v449 = vadd.s32 %v395, 4294967184
    %v450 = vperm.slane %v376, %v449
    %vm451 = vcmask 982912
    %v452 = vsel %vm451, %v450, %v448
    %v453 = vadd.s32 %v395, 4294967176
    %v454 = vperm.slane %v377, %v453
    %vm455 = vcmask 1048512
    %v456 = vsel %vm455, %v454, %v452
    %458 = vst [vmem:[#allocation3] sm:$0x1] %v456
    // Predicated region
    $region30: #{tpu_custom_call.1} parent=1 // pred_check
      _
    $region31: #{tpu_custom_call.1} parent=1 // pred_check_branch
      %460 = sbr.rel (0) target = $region33
    $region32: #{tpu_custom_call.1} parent=1 // pred_region
      %462 = vsyncadd [#allocation4], 0
      %s464 = sshll.u32 [#allocation3], 4
      %s465 = int_to_ptr.vmem [resolvable:$true] %s464
      %s466 = sshll.u32 %s7, 4
      %s467 = int_to_ptr.hbm [resolvable:$true] %s466
      %469 = dma.vmem_to_hbm [thread:$0]  %s465, 16, %s467, [#allocation4]
    $region33: #{tpu_custom_call.1} parent=1 // pred_fallthru
      _
    // Predicated region
    $region34: #{tpu_custom_call.1} parent=1 // pred_check
      _
    $region35: #{tpu_custom_call.1} parent=1 // pred_check_branch
      %471 = sbr.rel (0) target = $region37
    $region36: #{tpu_custom_call.1} parent=1 // pred_region
      %473 = dma.done [#allocation4], 16
    $region37: #{tpu_custom_call.1} parent=1 // pred_fallthru
      _
    %474 = vsyncpa [#allocation4], 1

</llo_original>
